<compile_context>
chip_gen: v7x
topology: tpu7x:2x2x1
jax: 0.10.0
libtpu: 0.0.40
codegen_flags: <defaults>
</compile_context>

<pallas_src>
import functools
import math

import jax
import jax.numpy as jnp
from jax import lax
from jax.experimental import pallas as pl
from jax.experimental.pallas import tpu as pltpu


_INV_SQRT2 = 1.0 / math.sqrt(2.0)


def _gelu_exact(x):
    # PyTorch nn.GELU() default: 0.5 * x * (1 + erf(x / sqrt(2)))
    return 0.5 * x * (1.0 + lax.erf(x * _INV_SQRT2))


def _relu(x):
    return jnp.maximum(x, 0.0)


def _get_activation(name):
    if name == "gelu":
        return _gelu_exact
    if name == "relu":
        return _relu
    raise ValueError(f"Unknown activation function: {name}")


def _ffn_kernel_fused(x_ref, w1_ref, b1_ref, w2_ref, b2_ref, o_ref, *, act):
    # Whole weight matrices resident in VMEM: one matmul pair per M-tile,
    # no hidden-dim reduction loop and no accumulator read-modify-write.
    h = jnp.dot(x_ref[...], w1_ref[...], preferred_element_type=jnp.float32)
    h = act(h + b1_ref[...].astype(jnp.float32))
    y = jnp.dot(h.astype(w2_ref.dtype), w2_ref[...],
                preferred_element_type=jnp.float32)
    o_ref[...] = (y + b2_ref[...].astype(jnp.float32)).astype(o_ref.dtype)


def _ffn_kernel_htiled(x_ref, w1_ref, b1_ref, w2_ref, b2_ref, o_ref, acc_ref,
                       *, act):
    j = pl.program_id(1)

    @pl.when(j == 0)
    def _init():
        # Fold b2 into the accumulator init (one broadcast per M-tile).
        acc_ref[...] = jnp.broadcast_to(
            b2_ref[...].astype(jnp.float32), acc_ref.shape)

    # First matmul on this H-tile (MXU), f32 accumulation.
    h = jnp.dot(x_ref[...], w1_ref[...], preferred_element_type=jnp.float32)
    h = act(h + b1_ref[...].astype(jnp.float32))
    # Second matmul: activation cast to the weight dtype (bf16 MXU fast path),
    # accumulate in f32.
    acc_ref[...] += jnp.dot(h.astype(w2_ref.dtype), w2_ref[...],
                            preferred_element_type=jnp.float32)

    @pl.when(j == pl.num_programs(1) - 1)
    def _finalize():
        o_ref[...] = acc_ref[...].astype(o_ref.dtype)


def _round_up(x, m):
    return (x + m - 1) // m * m


def _pick_tile_h(h, desired):
    """Largest multiple of 128 that is <= desired and divides H (else full H)."""
    desired = max(128, min(desired, h))
    for cand in range(desired - desired % 128, 0, -128):
        if h % cand == 0:
            return cand
    return h


def feed_forward(x, w1, b1, w2, b2, *, activation="gelu", block_m=512,
                 tile_h=None, compute_dtype=jnp.bfloat16, vmem_limit_bytes=None):
    """x: (B, n_embd); w1: (n_embd, 4n); b1: (1, 4n); w2: (4n, n_embd); b2: (1, n_embd).

    Output dtype follows x; matmul inputs are cast to `compute_dtype` once in the
    wrapper (pass jnp.float32 / None for exact f32 matmuls), accumulation is f32.
    """
    B, D = x.shape
    H = w1.shape[1]
    assert w1.shape == (D, H) and w2.shape == (H, D)
    assert b1.shape == (1, H) and b2.shape == (1, D)

    act = _get_activation(activation)
    out_dtype = x.dtype

    # One-time wrapper casts (not per-tile in the kernel).
    if compute_dtype is not None:
        x, w1, w2 = (t.astype(compute_dtype) for t in (x, w1, w2))
    c_item = jnp.dtype(x.dtype).itemsize
    o_item = jnp.dtype(out_dtype).itemsize
    b_item = jnp.dtype(b1.dtype).itemsize

    # Physical VMEM (64 MiB/TC on v7x, 128 MiB on v5e/v6e) and headroom for
    # Mosaic internal scratch / activation temporaries.
    try:
        phys_vmem = pltpu.get_tpu_info().vmem_capacity_bytes
    except Exception:
        phys_vmem = 64 * 1024 * 1024
    headroom = 16 * 1024 * 1024
    budget = max(phys_vmem - headroom, 24 * 1024 * 1024)

    # M-tile: multiple of 128 (full MXU passes) when possible, >=16 for bf16
    # sublane packing, clamped so tiny batches are not padded to 128.
    sub = 16 if c_item == 2 else 8
    block_m = max(sub, min(block_m, _round_up(B, sub)))
    block_m = _round_up(block_m, 128) if block_m >= 128 else _round_up(block_m, sub)
    B_pad = _round_up(B, block_m)
    # Keep at least 2 M-tiles so the "parallel" axis can feed both v7x cores.
    if B_pad // block_m < 2 and block_m >= 256:
        block_m = _round_up(block_m // 2, 128)
        B_pad = _round_up(B, block_m)

    def _footprint(bm, th, n_h_tiles):
        """Double-buffered VMEM working set for one grid step (bytes)."""
        f = 2 * bm * D * c_item                    # x block
        f += 2 * (D * th + th * D) * c_item        # W1 + W2 tiles
        f += 2 * (th + D) * b_item                 # b1 + b2
        f += 2 * bm * D * o_item                   # output block
        if n_h_tiles > 1:
            f += bm * D * 4                        # f32 accumulator scratch
        f += bm * th * (4 + c_item)                # hidden-activation temporaries
        return f

    # Hidden-dim tiling: fast path keeps both full weight matrices resident and
    # skips the reduction loop whenever they fit the VMEM budget.
    if tile_h is not None:
        tile_h = _pick_tile_h(H, tile_h)
    elif _footprint(block_m, H, 1) <= budget:
        tile_h = H
    else:
        tile_h = _pick_tile_h(H, 1024)
        while _footprint(block_m, tile_h, 2) > budget and tile_h > 128:
            nxt = _pick_tile_h(H, tile_h - 128)
            if nxt >= tile_h:
                break
            tile_h = nxt
        while _footprint(block_m, tile_h, 2) > budget and block_m > sub:
            block_m = max(sub, _round_up(block_m // 2, sub))
        B_pad = _round_up(B, block_m)

    # Pad the batch so the grid covers it exactly (handles arbitrary B).
    if B_pad != B:
        x = jnp.pad(x, ((0, B_pad - B), (0, 0)))
    m_tiles = B_pad // block_m
    fused = (tile_h == H)

    if vmem_limit_bytes is None:
        fp = _footprint(block_m, tile_h, 1 if fused else 2)
        vmem_limit_bytes = int(min(phys_vmem, max(32 * 1024 * 1024, fp + headroom)))

    # HBM traffic: weights stream once total on the fused path (block index is
    # constant), once per M-tile on the H-tiled path.
    weight_bytes = 2 * D * H * c_item + (H + D) * b_item
    if not fused:
        weight_bytes *= m_tiles
    cost = pl.CostEstimate(
        flops=4 * B_pad * D * H,
        transcendentals=B_pad * H if activation == "gelu" else 0,
        bytes_accessed=B_pad * D * (c_item + o_item) + weight_bytes,
    )

    if fused:
        grid = (m_tiles,)
        kernel = functools.partial(_ffn_kernel_fused, act=act)
        in_specs = [
            pl.BlockSpec((block_m, D), lambda i: (i, 0)),   # x M-tile
            pl.BlockSpec((D, H), lambda i: (0, 0)),         # W1 (resident)
            pl.BlockSpec((1, H), lambda i: (0, 0)),         # b1
            pl.BlockSpec((H, D), lambda i: (0, 0)),         # W2 (resident)
            pl.BlockSpec((1, D), lambda i: (0, 0)),         # b2
        ]
        out_specs = pl.BlockSpec((block_m, D), lambda i: (i, 0))
        scratch_shapes = []
        dim_sem = ("parallel",)
    else:
        grid = (m_tiles, H // tile_h)
        kernel = functools.partial(_ffn_kernel_htiled, act=act)
        in_specs = [
            pl.BlockSpec((block_m, D), lambda i, j: (i, 0)),  # x (resident over j)
            pl.BlockSpec((D, tile_h), lambda i, j: (0, j)),   # W1 column tile
            pl.BlockSpec((1, tile_h), lambda i, j: (0, j)),   # b1 tile
            pl.BlockSpec((tile_h, D), lambda i, j: (j, 0)),   # W2 row tile
            pl.BlockSpec((1, D), lambda i, j: (0, 0)),        # b2 (resident)
        ]
        out_specs = pl.BlockSpec((block_m, D), lambda i, j: (i, 0))
        scratch_shapes = [pltpu.VMEM((block_m, D), jnp.float32)]
        dim_sem = ("parallel", "arbitrary")

    out = pl.pallas_call(
        kernel,
        out_shape=jax.ShapeDtypeStruct((B_pad, D), out_dtype),
        grid_spec=pltpu.PrefetchScalarGridSpec(
            num_scalar_prefetch=0,
            grid=grid,
            in_specs=in_specs,
            out_specs=out_specs,
            scratch_shapes=scratch_shapes,
        ),
        compiler_params=pltpu.CompilerParams(
            dimension_semantics=dim_sem,
            vmem_limit_bytes=vmem_limit_bytes,
        ),
        cost_estimate=cost,
    )(x, w1, b1, w2, b2)

    return out[:B] if B_pad != B else out


if __name__ == "__main__":
    def _init_params(key, n_embd, dtype=jnp.float32):
        hidden = 4 * n_embd
        kw1, kb1, kw2, kb2 = jax.random.split(key, 4)
        lim1 = 1.0 / math.sqrt(n_embd)
        lim2 = 1.0 / math.sqrt(hidden)
        w1 = jax.random.uniform(kw1, (n_embd, hidden), dtype, -lim1, lim1)
        b1 = jax.random.uniform(kb1, (1, hidden), dtype, -lim1, lim1)
        w2 = jax.random.uniform(kw2, (hidden, n_embd), dtype, -lim2, lim2)
        b2 = jax.random.uniform(kb2, (1, n_embd), dtype, -lim2, lim2)
        return w1, b1, w2, b2

    def _ref(x, w1, b1, w2, b2, act=_gelu_exact, compute_dtype=None):
        out_dtype = x.dtype
        if compute_dtype is not None:
            x, w1, w2 = (t.astype(compute_dtype) for t in (x, w1, w2))
        h = act(jnp.dot(x, w1, preferred_element_type=jnp.float32)
                + b1.astype(jnp.float32))
        y = (jnp.dot(h.astype(w2.dtype), w2, preferred_element_type=jnp.float32)
             + b2.astype(jnp.float32))
        return y.astype(out_dtype)

    key = jax.random.PRNGKey(0)

    # Case 1: f32 compute, fused (weights-resident) path, tight tolerance.
    k1, k2, key = jax.random.split(key, 3)
    B, n_embd = 8, 128
    x = jax.random.normal(k1, (B, n_embd), dtype=jnp.float32)
    w1, b1, w2, b2 = _init_params(k2, n_embd)
    out = jax.block_until_ready(
        feed_forward(x, w1, b1, w2, b2, compute_dtype=jnp.float32))
    assert out.shape == (B, n_embd)
    assert jnp.allclose(out, _ref(x, w1, b1, w2, b2), atol=1e-4, rtol=1e-4)

    # Case 2: default bf16 streams, forced H-reduction path, ragged batch.
    k3, k4, key = jax.random.split(key, 3)
    B2, n_embd2 = 50, 128
    x2 = jax.random.normal(k3, (B2, n_embd2), dtype=jnp.float32)
    w1b, b1b, w2b, b2b = _init_params(k4, n_embd2)
    out2 = jax.block_until_ready(
        feed_forward(x2, w1b, b1b, w2b, b2b, block_m=16, tile_h=128))
    assert out2.shape == (B2, n_embd2)
    ref2 = _ref(x2, w1b, b1b, w2b, b2b, compute_dtype=jnp.bfloat16)
    assert jnp.allclose(out2, ref2, atol=2e-2, rtol=2e-2)

    # Case 3: relu activation, default auto-tiling (bf16, fused path).
    k5, k6 = jax.random.split(key, 2)
    B3, n_embd3 = 32, 128
    x3 = jax.random.normal(k5, (B3, n_embd3), dtype=jnp.float32)
    w1c, b1c, w2c, b2c = _init_params(k6, n_embd3)
    out3 = jax.block_until_ready(
        feed_forward(x3, w1c, b1c, w2c, b2c, activation="relu"))
    assert out3.shape == (B3, n_embd3)
    ref3 = _ref(x3, w1c, b1c, w2c, b2c, act=_relu, compute_dtype=jnp.bfloat16)
    assert jnp.allclose(out3, ref3, atol=2e-2, rtol=2e-2)

    print("KERNEL_OK")
</pallas_src>

<mosaic_0001>
module attributes {stable_mosaic.version = 11 : i64} {
  func.func @_ffn_kernel_fused(%arg0: i32, %arg1: memref<8x128xf32, #tpu.memory_space<vmem>>, %arg2: memref<128x512xf32, #tpu.memory_space<vmem>>, %arg3: memref<1x512xf32, #tpu.memory_space<vmem>>, %arg4: memref<512x128xf32, #tpu.memory_space<vmem>>, %arg5: memref<1x128xf32, #tpu.memory_space<vmem>>, %arg6: memref<8x128xf32, #tpu.memory_space<vmem>>) attributes {dimension_semantics = [#tpu.dimension_semantics<parallel>], iteration_bounds = array<i64: 1>, scalar_prefetch = 0 : i64, scratch_operands = 0 : i64, tpu.core_type = #tpu.core_type<tc>, window_params = [{transform_indices = @transform_0, window_bounds = array<i64: 8, 128>}, {pipeline_mode = #tpu.pipeline_mode<synchronous>, transform_indices = @transform_1, window_bounds = array<i64: 128, 512>}, {pipeline_mode = #tpu.pipeline_mode<synchronous>, transform_indices = @transform_2, window_bounds = array<i64: 1, 512>}, {pipeline_mode = #tpu.pipeline_mode<synchronous>, transform_indices = @transform_3, window_bounds = array<i64: 512, 128>}, {pipeline_mode = #tpu.pipeline_mode<synchronous>, transform_indices = @transform_4, window_bounds = array<i64: 1, 128>}, {transform_indices = @transform_5, window_bounds = array<i64: 8, 128>}]} {
    %c0 = arith.constant 0 : index
    %c0_0 = arith.constant 0 : index
    %0 = vector.load %arg1[%c0, %c0_0] : memref<8x128xf32, #tpu.memory_space<vmem>>, vector<8x128xf32>
    %c0_1 = arith.constant 0 : index
    %c0_2 = arith.constant 0 : index
    %1 = vector.load %arg2[%c0_1, %c0_2] : memref<128x512xf32, #tpu.memory_space<vmem>>, vector<128x512xf32>
    %cst = arith.constant dense<0.000000e+00> : vector<8x512xf32>
    %2 = tpu.matmul %0, %1, %cst {dimension_numbers = #tpu.dot_dimension_numbers<[1], [0], [0], [1], [0, 0, 1, 1], [], []>} : vector<8x128xf32>, vector<128x512xf32>, vector<8x512xf32> -> vector<8x512xf32>
    %c0_3 = arith.constant 0 : index
    %c0_4 = arith.constant 0 : index
    %3 = vector.load %arg3[%c0_3, %c0_4] : memref<1x512xf32, #tpu.memory_space<vmem>>, vector<1x512xf32>
    %4 = vector.broadcast %3 : vector<1x512xf32> to vector<8x512xf32>
    %5 = arith.addf %2, %4 : vector<8x512xf32>
    %cst_5 = arith.constant 5.000000e-01 : f32
    %6 = vector.broadcast %cst_5 : f32 to vector<8x512xf32>
    %7 = arith.mulf %6, %5 : vector<8x512xf32>
    %cst_6 = arith.constant 0.707106769 : f32
    %8 = vector.broadcast %cst_6 : f32 to vector<8x512xf32>
    %9 = arith.mulf %5, %8 : vector<8x512xf32>
    %10 = math.erf %9 : vector<8x512xf32>
    %cst_7 = arith.constant 1.000000e+00 : f32
    %11 = vector.broadcast %cst_7 : f32 to vector<8x512xf32>
    %12 = arith.addf %11, %10 : vector<8x512xf32>
    %13 = arith.mulf %7, %12 : vector<8x512xf32>
    %c0_8 = arith.constant 0 : index
    %c0_9 = arith.constant 0 : index
    %14 = vector.load %arg4[%c0_8, %c0_9] : memref<512x128xf32, #tpu.memory_space<vmem>>, vector<512x128xf32>
    %cst_10 = arith.constant dense<0.000000e+00> : vector<8x128xf32>
    %15 = tpu.matmul %13, %14, %cst_10 {dimension_numbers = #tpu.dot_dimension_numbers<[1], [0], [0], [1], [0, 0, 1, 1], [], []>} : vector<8x512xf32>, vector<512x128xf32>, vector<8x128xf32> -> vector<8x128xf32>
    %c0_11 = arith.constant 0 : index
    %c0_12 = arith.constant 0 : index
    %16 = vector.load %arg5[%c0_11, %c0_12] : memref<1x128xf32, #tpu.memory_space<vmem>>, vector<1x128xf32>
    %17 = vector.broadcast %16 : vector<1x128xf32> to vector<8x128xf32>
    %18 = arith.addf %15, %17 : vector<8x128xf32>
    %c0_13 = arith.constant 0 : index
    %c0_14 = arith.constant 0 : index
    %19 = vector.load %arg6[%c0_13, %c0_14] : memref<8x128xf32, #tpu.memory_space<vmem>>, vector<8x128xf32>
    tpu.vector_store %arg6[%c0_13, %c0_14], %18 {strides = array<i32>} : memref<8x128xf32, #tpu.memory_space<vmem>>, vector<8x128xf32>,
    return
  }
  func.func @transform_0(%arg0: i32) -> (i32, i32) {
    %c0_i32 = arith.constant 0 : i32
    %c0_i32_0 = arith.constant 0 : i32
    return %arg0, %c0_i32 : i32, i32
  }
  func.func @transform_1(%arg0: i32) -> (i32, i32) {
    %c0_i32 = arith.constant 0 : i32
    %c0_i32_0 = arith.constant 0 : i32
    %c0_i32_1 = arith.constant 0 : i32
    return %c0_i32, %c0_i32_0 : i32, i32
  }
  func.func @transform_2(%arg0: i32) -> (i32, i32) {
    %c0_i32 = arith.constant 0 : i32
    %c0_i32_0 = arith.constant 0 : i32
    %c0_i32_1 = arith.constant 0 : i32
    return %c0_i32, %c0_i32_0 : i32, i32
  }
  func.func @transform_3(%arg0: i32) -> (i32, i32) {
    %c0_i32 = arith.constant 0 : i32
    %c0_i32_0 = arith.constant 0 : i32
    %c0_i32_1 = arith.constant 0 : i32
    return %c0_i32, %c0_i32_0 : i32, i32
  }
  func.func @transform_4(%arg0: i32) -> (i32, i32) {
    %c0_i32 = arith.constant 0 : i32
    %c0_i32_0 = arith.constant 0 : i32
    %c0_i32_1 = arith.constant 0 : i32
    return %c0_i32, %c0_i32_0 : i32, i32
  }
  func.func @transform_5(%arg0: i32) -> (i32, i32) {
    %c0_i32 = arith.constant 0 : i32
    %c0_i32_0 = arith.constant 0 : i32
    return %arg0, %c0_i32 : i32, i32
  }
}

</mosaic_0001>

<llo_original>
// kernel: tpu_custom_call.1
$region0: #{tpu_custom_call.1}
  #allocation0 [shape = 'u32[]', space=smem, size = 0x4, offset = 0x4, fixed_abs, tag = 'smem constant byte address 0x4 - core index']
  #allocation1 [shape = 'u32[144,128]{1,0:T(1,128)}', space=vmem, size = 0x12000, scoped, tag = 'internal scratch']
  %s0 = inlined_call_operand.hbm [shape: f32[8,128], index: 0, kind: input, shape index: {}]
  %s1 = inlined_call_operand.hbm [shape: f32[128,512], index: 1, kind: input, shape index: {}]
  %s2 = inlined_call_operand.vmem [shape: f32[1,512], index: 2, kind: input, shape index: {}]
  %s3 = inlined_call_operand.hbm [shape: f32[512,128], index: 3, kind: input, shape index: {}]
  %s4 = inlined_call_operand.vmem [shape: f32[1,128], index: 4, kind: input, shape index: {}]
  %s5 = inlined_call_operand.hbm [shape: f32[8,128], index: 5, kind: output, shape index: {}]
  %s6 = sld [smem:[#allocation0]]
  $region42: #{tpu_custom_call.1} parent=0
    _
  %s8 = ssub.s32 1, %s6
  %s9 = scalar_select 0, %s8, %s6
  $region1: #{tpu_custom_call.1} parent=0
    #allocation2 [shape = 'u8[4096]{0}', space=vmem, size = 0x1000, scoped, tag = 'input window, operand 0, single buffered']
    #allocation3 [shape = 's32[1]{0}', space=sflag, size = 0x4, scoped, tag = 'scoped memory for tpu_custom_call.1']
    #allocation4 [shape = 's32[1]{0}', space=sflag, size = 0x4, scoped, tag = 'scoped memory for tpu_custom_call.1']
    #allocation5 [shape = 'u8[262144]{0}', space=vmem, size = 0x40000, scoped, tag = 'input window, operand 1, single buffered']
    #allocation6 [shape = 's32[1]{0}', space=sflag, size = 0x4, scoped, tag = 'scoped memory for tpu_custom_call.1']
    #allocation7 [shape = 'u8[262144]{0}', space=vmem, size = 0x40000, scoped, tag = 'input window, operand 3, single buffered']
    #allocation8 [shape = 'u8[4096]{0}', space=vmem, size = 0x1000, scoped, tag = 'output window, operand 0, single buffered']
    %10 = vsyncpa [#allocation3], 0
    %11 = vsyncpa [#allocation6], 0
    %12 = vsyncpa [#allocation4], 0
    // Predicated region
    $region2: #{tpu_custom_call.1} parent=1 // pred_check
      _
    $region3: #{tpu_custom_call.1} parent=1 // pred_check_branch
      %14 = sbr.rel (0) target = $region5
    $region4: #{tpu_custom_call.1} parent=1 // pred_region
      %s16 = ssub.s32 128, 128
      %17 = vsyncadd [#allocation3], %s16
      %s19 = sshll.u32 [#allocation2], 4
      %s20 = int_to_ptr.vmem [resolvable:$true] %s19
      %22 = dma.hbm_to_vmem [thread:$0]  %s0, 128, %s20, [#allocation3]
    $region5: #{tpu_custom_call.1} parent=1 // pred_fallthru
      _
    // Predicated region
    $region6: #{tpu_custom_call.1} parent=1 // pred_check
      _
    $region7: #{tpu_custom_call.1} parent=1 // pred_check_branch
      %24 = sbr.rel (0) target = $region9
    $region8: #{tpu_custom_call.1} parent=1 // pred_region
      %s26 = ssub.s32 8192, 8192
      %27 = vsyncadd [#allocation6], %s26
      %s28 = sshll.u32 [#allocation5], 4
      %s29 = int_to_ptr.vmem [resolvable:$true] %s28
      %34 = dma.hbm_to_vmem [thread:$0]  %s1, 8192, %s29, [#allocation6], 512, 512, 32
    $region9: #{tpu_custom_call.1} parent=1 // pred_fallthru
      _
    // Predicated region
    $region10: #{tpu_custom_call.1} parent=1 // pred_check
      _
    $region11: #{tpu_custom_call.1} parent=1 // pred_check_branch
      %36 = sbr.rel (0) target = $region13
    $region12: #{tpu_custom_call.1} parent=1 // pred_region
      _
    $region13: #{tpu_custom_call.1} parent=1 // pred_fallthru
      _
    // Predicated region
    $region14: #{tpu_custom_call.1} parent=1 // pred_check
      _
    $region15: #{tpu_custom_call.1} parent=1 // pred_check_branch
      %38 = sbr.rel (0) target = $region17
    $region16: #{tpu_custom_call.1} parent=1 // pred_region
      %s40 = ssub.s32 8192, 8192
      %41 = vsyncadd [#allocation6], %s40
      %s42 = sshll.u32 [#allocation7], 4
      %s43 = int_to_ptr.vmem [resolvable:$true] %s42
      %48 = dma.hbm_to_vmem [thread:$0]  %s3, 8192, %s43, [#allocation6], 128, 128, 8
    $region17: #{tpu_custom_call.1} parent=1 // pred_fallthru
      _
    // Predicated region
    $region18: #{tpu_custom_call.1} parent=1 // pred_check
      _
    $region19: #{tpu_custom_call.1} parent=1 // pred_check_branch
      %50 = sbr.rel (0) target = $region21
    $region20: #{tpu_custom_call.1} parent=1 // pred_region
      _
    $region21: #{tpu_custom_call.1} parent=1 // pred_fallthru
      _
    // Predicated region
    $region22: #{tpu_custom_call.1} parent=1 // pred_check
      _
    $region23: #{tpu_custom_call.1} parent=1 // pred_check_branch
      %52 = sbr.rel (0) target = $region25
    $region24: #{tpu_custom_call.1} parent=1 // pred_region
      %53 = dma.done [#allocation3], 128
    $region25: #{tpu_custom_call.1} parent=1 // pred_fallthru
      _
    // Predicated region
    $region26: #{tpu_custom_call.1} parent=1 // pred_check
      _
    $region27: #{tpu_custom_call.1} parent=1 // pred_check_branch
      %55 = sbr.rel (0) target = $region29
    $region28: #{tpu_custom_call.1} parent=1 // pred_region
      %56 = dma.done [#allocation6], 8192
    $region29: #{tpu_custom_call.1} parent=1 // pred_fallthru
      _
    // Predicated region
    $region30: #{tpu_custom_call.1} parent=1 // pred_check
      _
    $region31: #{tpu_custom_call.1} parent=1 // pred_check_branch
      %58 = sbr.rel (0) target = $region33
    $region32: #{tpu_custom_call.1} parent=1 // pred_region
      %59 = dma.done [#allocation6], 8192
    $region33: #{tpu_custom_call.1} parent=1 // pred_fallthru
      _
    %v60 = vld [vmem:[#allocation2] sm:$0xff]
    %v61 = vld [vmem:[#allocation5] sm:$0xff]
    %v62 = vld [vmem:[#allocation5 + $0x8] sm:$0xff]
    %v63 = vld [vmem:[#allocation5 + $0x10] sm:$0xff]
    %v64 = vld [vmem:[#allocation5 + $0x18] sm:$0xff]
    %v65 = vld [vmem:[#allocation5 + $0x20] sm:$0xff]
    %v66 = vld [vmem:[#allocation5 + $0x28] sm:$0xff]
    %v67 = vld [vmem:[#allocation5 + $0x30] sm:$0xff]
    %v68 = vld [vmem:[#allocation5 + $0x38] sm:$0xff]
    %v69 = vld [vmem:[#allocation5 + $0x40] sm:$0xff]
    %v70 = vld [vmem:[#allocation5 + $0x48] sm:$0xff]
    %v71 = vld [vmem:[#allocation5 + $0x50] sm:$0xff]
    %v72 = vld [vmem:[#allocation5 + $0x58] sm:$0xff]
    %v73 = vld [vmem:[#allocation5 + $0x60] sm:$0xff]
    %v74 = vld [vmem:[#allocation5 + $0x68] sm:$0xff]
    %v75 = vld [vmem:[#allocation5 + $0x70] sm:$0xff]
    %v76 = vld [vmem:[#allocation5 + $0x78] sm:$0xff]
    %v77 = vld [vmem:[#allocation5 + $0x80] sm:$0xff]
    %v78 = vld [vmem:[#allocation5 + $0x88] sm:$0xff]
    %v79 = vld [vmem:[#allocation5 + $0x90] sm:$0xff]
    %v80 = vld [vmem:[#allocation5 + $0x98] sm:$0xff]
    %v81 = vld [vmem:[#allocation5 + $0xa0] sm:$0xff]
    %v82 = vld [vmem:[#allocation5 + $0xa8] sm:$0xff]
    %v83 = vld [vmem:[#allocation5 + $0xb0] sm:$0xff]
    %v84 = vld [vmem:[#allocation5 + $0xb8] sm:$0xff]
    %v85 = vld [vmem:[#allocation5 + $0xc0] sm:$0xff]
    %v86 = vld [vmem:[#allocation5 + $0xc8] sm:$0xff]
    %v87 = vld [vmem:[#allocation5 + $0xd0] sm:$0xff]
    %v88 = vld [vmem:[#allocation5 + $0xd8] sm:$0xff]
    %v89 = vld [vmem:[#allocation5 + $0xe0] sm:$0xff]
    %v90 = vld [vmem:[#allocation5 + $0xe8] sm:$0xff]
    %v91 = vld [vmem:[#allocation5 + $0xf0] sm:$0xff]
    %v92 = vld [vmem:[#allocation5 + $0xf8] sm:$0xff]
    %v93 = vld [vmem:[#allocation5 + $0x100] sm:$0xff]
    %v94 = vld [vmem:[#allocation5 + $0x108] sm:$0xff]
    %v95 = vld [vmem:[#allocation5 + $0x110] sm:$0xff]
    %v96 = vld [vmem:[#allocation5 + $0x118] sm:$0xff]
    %v97 = vld [vmem:[#allocation5 + $0x120] sm:$0xff]
    %v98 = vld [vmem:[#allocation5 + $0x128] sm:$0xff]
    %v99 = vld [vmem:[#allocation5 + $0x130] sm:$0xff]
    %v100 = vld [vmem:[#allocation5 + $0x138] sm:$0xff]
    %v101 = vld [vmem:[#allocation5 + $0x140] sm:$0xff]
    %v102 = vld [vmem:[#allocation5 + $0x148] sm:$0xff]
    %v103 = vld [vmem:[#allocation5 + $0x150] sm:$0xff]
    %v104 = vld [vmem:[#allocation5 + $0x158] sm:$0xff]
    %v105 = vld [vmem:[#allocation5 + $0x160] sm:$0xff]
    %v106 = vld [vmem:[#allocation5 + $0x168] sm:$0xff]
    %v107 = vld [vmem:[#allocation5 + $0x170] sm:$0xff]
    %v108 = vld [vmem:[#allocation5 + $0x178] sm:$0xff]
    %v109 = vld [vmem:[#allocation5 + $0x180] sm:$0xff]
    %v110 = vld [vmem:[#allocation5 + $0x188] sm:$0xff]
    %v111 = vld [vmem:[#allocation5 + $0x190] sm:$0xff]
    %v112 = vld [vmem:[#allocation5 + $0x198] sm:$0xff]
    %v113 = vld [vmem:[#allocation5 + $0x1a0] sm:$0xff]
    %v114 = vld [vmem:[#allocation5 + $0x1a8] sm:$0xff]
    %v115 = vld [vmem:[#allocation5 + $0x1b0] sm:$0xff]
    %v116 = vld [vmem:[#allocation5 + $0x1b8] sm:$0xff]
    %v117 = vld [vmem:[#allocation5 + $0x1c0] sm:$0xff]
    %v118 = vld [vmem:[#allocation5 + $0x1c8] sm:$0xff]
    %v119 = vld [vmem:[#allocation5 + $0x1d0] sm:$0xff]
    %v120 = vld [vmem:[#allocation5 + $0x1d8] sm:$0xff]
    %v121 = vld [vmem:[#allocation5 + $0x1e0] sm:$0xff]
    %v122 = vld [vmem:[#allocation5 + $0x1e8] sm:$0xff]
    %v123 = vld [vmem:[#allocation5 + $0x1f0] sm:$0xff]
    %v124 = vld [vmem:[#allocation5 + $0x1f8] sm:$0xff]
    %v125 = vld [vmem:[%s2] sm:$0xf]
    %v127 = vlaneseq
    %v128 = vshrl.u32 %v127, 7
    %v129 = vsub.s32 0, %v128
    %v130 = vrot.slane %v125, %v129
    %v131 = vlaneseq
    %v132 = vshrl.u32 %v131, 7
    %v133 = vsub.s32 1, %v132
    %v134 = vrot.slane %v125, %v133
    %v135 = vlaneseq
    %v136 = vshrl.u32 %v135, 7
    %v137 = vsub.s32 2, %v136
    %v138 = vrot.slane %v125, %v137
    %v139 = vlaneseq
    %v140 = vshrl.u32 %v139, 7
    %v141 = vsub.s32 3, %v140
    %v142 = vrot.slane %v125, %v141
    %147 = vmatprep.subr.mxu0 %v62
    %148 = vmatpush1.msra.mxu0 %v61
    %149 = vmatprep.subr.mxu0 %v66
    %150 = vmatpush1.msra.mxu0 %v65
    %151 = vmatprep.subr.mxu0 %v70
    %152 = vmatpush1.msra.mxu0 %v69
    %153 = vmatprep.subr.mxu0 %v74
    %154 = vmatpush1.msra.mxu0 %v73
    %155 = vmatprep.subr.mxu0 %v78
    %156 = vmatpush1.msra.mxu0 %v77
    %157 = vmatprep.subr.mxu0 %v82
    %158 = vmatpush1.msra.mxu0 %v81
    %159 = vmatprep.subr.mxu0 %v86
    %160 = vmatpush1.msra.mxu0 %v85
    %161 = vmatprep.subr.mxu0 %v90
    %162 = vmatpush1.msra.mxu0 %v89
    %163 = vmatprep.subr.mxu0 %v94
    %164 = vmatpush1.msra.mxu0 %v93
    %165 = vmatprep.subr.mxu0 %v98
    %166 = vmatpush1.msra.mxu0 %v97
    %167 = vmatprep.subr.mxu0 %v102
    %168 = vmatpush1.msra.mxu0 %v101
    %169 = vmatprep.subr.mxu0 %v106
    %170 = vmatpush1.msra.mxu0 %v105
    %171 = vmatprep.subr.mxu0 %v110
    %172 = vmatpush1.msra.mxu0 %v109
    %173 = vmatprep.subr.mxu0 %v114
    %174 = vmatpush1.msra.mxu0 %v113
    %175 = vmatprep.subr.mxu0 %v118
    %176 = vmatpush1.msra.mxu0 %v117
    %177 = vmatprep.subr.mxu0 %v122
    %178 = vmatpush1.msra.mxu0 %v121
    %179 = vmatprep.subr.mxu0 0.0
    %180 = vmatpush1.msra.mxu0 0.0
    %181 = vmatprep.subr.mxu0 0.0
    %182 = vmatpush1.msra.mxu0 0.0
    %183 = vmatprep.subr.mxu0 0.0
    %184 = vmatpush1.msra.mxu0 0.0
    %185 = vmatprep.subr.mxu0 0.0
    %186 = vmatpush1.msra.mxu0 0.0
    %187 = vmatprep.subr.mxu0 0.0
    %188 = vmatpush1.msra.mxu0 0.0
    %189 = vmatprep.subr.mxu0 0.0
    %190 = vmatpush1.msra.mxu0 0.0
    %191 = vmatprep.subr.mxu0 0.0
    %192 = vmatpush1.msra.mxu0 0.0
    %193 = vmatprep.subr.mxu0 0.0
    %194 = vmatpush1.msra.mxu0 0.0
    %195 = vmatprep.subr.mxu0 0.0
    %196 = vmatpush1.msra.mxu0 0.0
    %197 = vmatprep.subr.mxu0 0.0
    %198 = vmatpush1.msra.mxu0 0.0
    %199 = vmatprep.subr.mxu0 0.0
    %200 = vmatpush1.msra.mxu0 0.0
    %201 = vmatprep.subr.mxu0 0.0
    %202 = vmatpush1.msra.mxu0 0.0
    %203 = vmatprep.subr.mxu0 0.0
    %204 = vmatpush1.msra.mxu0 0.0
    %205 = vmatprep.subr.mxu0 0.0
    %206 = vmatpush1.msra.mxu0 0.0
    %207 = vmatprep.subr.mxu0 0.0
    %208 = vmatpush1.msra.mxu0 0.0
    %209 = vmatprep.subr.mxu0 0.0
    %210 = vmatpush1.msra.mxu0 0.0
    %211 = vmatprep.mubr.f32.mxu0 0.0
    %212 = vmatmul.mubr.f32.gmra.mrb[0].mxu0 %v60
    %v213 = vpop.f32.mrb[0].mxu0
    %v214 = vadd.f32 %v130, %v213
    %v215 = vpop.f32.mrb[0].mxu0
    %v216 = vadd.f32 %v134, %v215
    %217 = vdwg.mxu0
    %218 = vmatprep.subr.mxu0 %v64
    %219 = vmatpush1.msra.mxu0 %v63
    %220 = vmatprep.subr.mxu0 %v68
    %221 = vmatpush1.msra.mxu0 %v67
    %222 = vmatprep.subr.mxu0 %v72
    %223 = vmatpush1.msra.mxu0 %v71
    %224 = vmatprep.subr.mxu0 %v76
    %225 = vmatpush1.msra.mxu0 %v75
    %226 = vmatprep.subr.mxu0 %v80
    %227 = vmatpush1.msra.mxu0 %v79
    %228 = vmatprep.subr.mxu0 %v84
    %229 = vmatpush1.msra.mxu0 %v83
    %230 = vmatprep.subr.mxu0 %v88
    %231 = vmatpush1.msra.mxu0 %v87
    %232 = vmatprep.subr.mxu0 %v92
    %233 = vmatpush1.msra.mxu0 %v91
    %234 = vmatprep.subr.mxu0 %v96
    %235 = vmatpush1.msra.mxu0 %v95
    %236 = vmatprep.subr.mxu0 %v100
    %237 = vmatpush1.msra.mxu0 %v99
    %238 = vmatprep.subr.mxu0 %v104
    %239 = vmatpush1.msra.mxu0 %v103
    %240 = vmatprep.subr.mxu0 %v108
    %241 = vmatpush1.msra.mxu0 %v107
    %242 = vmatprep.subr.mxu0 %v112
    %243 = vmatpush1.msra.mxu0 %v111
    %244 = vmatprep.subr.mxu0 %v116
    %245 = vmatpush1.msra.mxu0 %v115
    %246 = vmatprep.subr.mxu0 %v120
    %247 = vmatpush1.msra.mxu0 %v119
    %248 = vmatprep.subr.mxu0 %v124
    %249 = vmatpush1.msra.mxu0 %v123
    %250 = vmatprep.subr.mxu0 0.0
    %251 = vmatpush1.msra.mxu0 0.0
    %252 = vmatprep.subr.mxu0 0.0
    %253 = vmatpush1.msra.mxu0 0.0
    %254 = vmatprep.subr.mxu0 0.0
    %255 = vmatpush1.msra.mxu0 0.0
    %256 = vmatprep.subr.mxu0 0.0
    %257 = vmatpush1.msra.mxu0 0.0
    %258 = vmatprep.subr.mxu0 0.0
    %259 = vmatpush1.msra.mxu0 0.0
    %260 = vmatprep.subr.mxu0 0.0
    %261 = vmatpush1.msra.mxu0 0.0
    %262 = vmatprep.subr.mxu0 0.0
    %263 = vmatpush1.msra.mxu0 0.0
    %264 = vmatprep.subr.mxu0 0.0
    %265 = vmatpush1.msra.mxu0 0.0
    %266 = vmatprep.subr.mxu0 0.0
    %267 = vmatpush1.msra.mxu0 0.0
    %268 = vmatprep.subr.mxu0 0.0
    %269 = vmatpush1.msra.mxu0 0.0
    %270 = vmatprep.subr.mxu0 0.0
    %271 = vmatpush1.msra.mxu0 0.0
    %272 = vmatprep.subr.mxu0 0.0
    %273 = vmatpush1.msra.mxu0 0.0
    %274 = vmatprep.subr.mxu0 0.0
    %275 = vmatpush1.msra.mxu0 0.0
    %276 = vmatprep.subr.mxu0 0.0
    %277 = vmatpush1.msra.mxu0 0.0
    %278 = vmatprep.subr.mxu0 0.0
    %279 = vmatpush1.msra.mxu0 0.0
    %280 = vmatprep.subr.mxu0 0.0
    %281 = vmatpush1.msra.mxu0 0.0
    %282 = vmatprep.mubr.f32.mxu0 0.0
    %283 = vmatmul.mubr.f32.gmra.mrb[0].mxu0 %v60
    %v284 = vpop.f32.mrb[0].mxu0
    %v285 = vadd.f32 %v138, %v284
    %v286 = vpop.f32.mrb[0].mxu0
    %v287 = vadd.f32 %v142, %v286
    %288 = vdwg.mxu0
    %v289 = vmul.f32 %v214, 0.5
    %v290 = vmul.f32 %v216, 0.5
    %v291 = vmul.f32 %v285, 0.5
    %v292 = vmul.f32 %v287, 0.5
    %v293 = vmul.f32 %v214, 0.70710677
    %v294 = vmul.f32 %v216, 0.70710677
    %v295 = vmul.f32 %v285, 0.70710677
    %v296 = vmul.f32 %v287, 0.70710677
    %v297 = verf.f32.pop %v293
    %v298 = verf.f32.pop %v294
    %v299 = verf.f32.pop %v295
    %v300 = verf.f32.pop %v296
    %v301 = vadd.f32 %v297, 1.0
    %v302 = vadd.f32 %v298, 1.0
    %v303 = vadd.f32 %v299, 1.0
    %v304 = vadd.f32 %v300, 1.0
    %v305 = vmul.f32 %v289, %v301
    %v306 = vmul.f32 %v290, %v302
    %v307 = vmul.f32 %v291, %v303
    %v308 = vmul.f32 %v292, %v304
    %v309 = vld [vmem:[#allocation7] sm:$0xff]
    %v310 = vld [vmem:[#allocation7 + $0x8] sm:$0xff]
    %v311 = vld [vmem:[#allocation7 + $0x10] sm:$0xff]
    %v312 = vld [vmem:[#allocation7 + $0x18] sm:$0xff]
    %v313 = vld [vmem:[#allocation7 + $0x20] sm:$0xff]
    %v314 = vld [vmem:[#allocation7 + $0x28] sm:$0xff]
    %v315 = vld [vmem:[#allocation7 + $0x30] sm:$0xff]
    %v316 = vld [vmem:[#allocation7 + $0x38] sm:$0xff]
    %v317 = vld [vmem:[#allocation7 + $0x40] sm:$0xff]
    %v318 = vld [vmem:[#allocation7 + $0x48] sm:$0xff]
    %v319 = vld [vmem:[#allocation7 + $0x50] sm:$0xff]
    %v320 = vld [vmem:[#allocation7 + $0x58] sm:$0xff]
    %v321 = vld [vmem:[#allocation7 + $0x60] sm:$0xff]
    %v322 = vld [vmem:[#allocation7 + $0x68] sm:$0xff]
    %v323 = vld [vmem:[#allocation7 + $0x70] sm:$0xff]
    %v324 = vld [vmem:[#allocation7 + $0x78] sm:$0xff]
    %v325 = vld [vmem:[#allocation7 + $0x80] sm:$0xff]
    %v326 = vld [vmem:[#allocation7 + $0x88] sm:$0xff]
    %v327 = vld [vmem:[#allocation7 + $0x90] sm:$0xff]
    %v328 = vld [vmem:[#allocation7 + $0x98] sm:$0xff]
    %v329 = vld [vmem:[#allocation7 + $0xa0] sm:$0xff]
    %v330 = vld [vmem:[#allocation7 + $0xa8] sm:$0xff]
    %v331 = vld [vmem:[#allocation7 + $0xb0] sm:$0xff]
    %v332 = vld [vmem:[#allocation7 + $0xb8] sm:$0xff]
    %v333 = vld [vmem:[#allocation7 + $0xc0] sm:$0xff]
    %v334 = vld [vmem:[#allocation7 + $0xc8] sm:$0xff]
    %v335 = vld [vmem:[#allocation7 + $0xd0] sm:$0xff]
    %v336 = vld [vmem:[#allocation7 + $0xd8] sm:$0xff]
    %v337 = vld [vmem:[#allocation7 + $0xe0] sm:$0xff]
    %v338 = vld [vmem:[#allocation7 + $0xe8] sm:$0xff]
    %v339 = vld [vmem:[#allocation7 + $0xf0] sm:$0xff]
    %v340 = vld [vmem:[#allocation7 + $0xf8] sm:$0xff]
    %v341 = vld [vmem:[#allocation7 + $0x100] sm:$0xff]
    %v342 = vld [vmem:[#allocation7 + $0x108] sm:$0xff]
    %v343 = vld [vmem:[#allocation7 + $0x110] sm:$0xff]
    %v344 = vld [vmem:[#allocation7 + $0x118] sm:$0xff]
    %v345 = vld [vmem:[#allocation7 + $0x120] sm:$0xff]
    %v346 = vld [vmem:[#allocation7 + $0x128] sm:$0xff]
    %v347 = vld [vmem:[#allocation7 + $0x130] sm:$0xff]
    %v348 = vld [vmem:[#allocation7 + $0x138] sm:$0xff]
    %v349 = vld [vmem:[#allocation7 + $0x140] sm:$0xff]
    %v350 = vld [vmem:[#allocation7 + $0x148] sm:$0xff]
    %v351 = vld [vmem:[#allocation7 + $0x150] sm:$0xff]
    %v352 = vld [vmem:[#allocation7 + $0x158] sm:$0xff]
    %v353 = vld [vmem:[#allocation7 + $0x160] sm:$0xff]
    %v354 = vld [vmem:[#allocation7 + $0x168] sm:$0xff]
    %v355 = vld [vmem:[#allocation7 + $0x170] sm:$0xff]
    %v356 = vld [vmem:[#allocation7 + $0x178] sm:$0xff]
    %v357 = vld [vmem:[#allocation7 + $0x180] sm:$0xff]
    %v358 = vld [vmem:[#allocation7 + $0x188] sm:$0xff]
    %v359 = vld [vmem:[#allocation7 + $0x190] sm:$0xff]
    %v360 = vld [vmem:[#allocation7 + $0x198] sm:$0xff]
    %v361 = vld [vmem:[#allocation7 + $0x1a0] sm:$0xff]
    %v362 = vld [vmem:[#allocation7 + $0x1a8] sm:$0xff]
    %v363 = vld [vmem:[#allocation7 + $0x1b0] sm:$0xff]
    %v364 = vld [vmem:[#allocation7 + $0x1b8] sm:$0xff]
    %v365 = vld [vmem:[#allocation7 + $0x1c0] sm:$0xff]
    %v366 = vld [vmem:[#allocation7 + $0x1c8] sm:$0xff]
    %v367 = vld [vmem:[#allocation7 + $0x1d0] sm:$0xff]
    %v368 = vld [vmem:[#allocation7 + $0x1d8] sm:$0xff]
    %v369 = vld [vmem:[#allocation7 + $0x1e0] sm:$0xff]
    %v370 = vld [vmem:[#allocation7 + $0x1e8] sm:$0xff]
    %v371 = vld [vmem:[#allocation7 + $0x1f0] sm:$0xff]
    %v372 = vld [vmem:[#allocation7 + $0x1f8] sm:$0xff]
    %v373 = vld [vmem:[%s4] sm:$0x1]
    %v375 = vlaneseq
    %v376 = vshrl.u32 %v375, 7
    %v377 = vsub.s32 0, %v376
    %v378 = vrot.slane %v373, %v377
    %380 = vmatprep.subr.mxu0 0.0
    %381 = vmatpush1.msra.mxu0 %v309
    %382 = vmatprep.subr.mxu0 0.0
    %383 = vmatpush1.msra.mxu0 %v310
    %384 = vmatprep.subr.mxu0 0.0
    %385 = vmatpush1.msra.mxu0 %v311
    %386 = vmatprep.subr.mxu0 0.0
    %387 = vmatpush1.msra.mxu0 %v312
    %388 = vmatprep.subr.mxu0 0.0
    %389 = vmatpush1.msra.mxu0 %v313
    %390 = vmatprep.subr.mxu0 0.0
    %391 = vmatpush1.msra.mxu0 %v314
    %392 = vmatprep.subr.mxu0 0.0
    %393 = vmatpush1.msra.mxu0 %v315
    %394 = vmatprep.subr.mxu0 0.0
    %395 = vmatpush1.msra.mxu0 %v316
    %396 = vmatprep.subr.mxu0 0.0
    %397 = vmatpush1.msra.mxu0 %v317
    %398 = vmatprep.subr.mxu0 0.0
    %399 = vmatpush1.msra.mxu0 %v318
    %400 = vmatprep.subr.mxu0 0.0
    %401 = vmatpush1.msra.mxu0 %v319
    %402 = vmatprep.subr.mxu0 0.0
    %403 = vmatpush1.msra.mxu0 %v320
    %404 = vmatprep.subr.mxu0 0.0
    %405 = vmatpush1.msra.mxu0 %v321
    %406 = vmatprep.subr.mxu0 0.0
    %407 = vmatpush1.msra.mxu0 %v322
    %408 = vmatprep.subr.mxu0 0.0
    %409 = vmatpush1.msra.mxu0 %v323
    %410 = vmatprep.subr.mxu0 0.0
    %411 = vmatpush1.msra.mxu0 %v324
    %412 = vmatprep.subr.mxu0 0.0
    %413 = vmatpush1.msra.mxu0 %v325
    %414 = vmatprep.subr.mxu0 0.0
    %415 = vmatpush1.msra.mxu0 %v326
    %416 = vmatprep.subr.mxu0 0.0
    %417 = vmatpush1.msra.mxu0 %v327
    %418 = vmatprep.subr.mxu0 0.0
    %419 = vmatpush1.msra.mxu0 %v328
    %420 = vmatprep.subr.mxu0 0.0
    %421 = vmatpush1.msra.mxu0 %v329
    %422 = vmatprep.subr.mxu0 0.0
    %423 = vmatpush1.msra.mxu0 %v330
    %424 = vmatprep.subr.mxu0 0.0
    %425 = vmatpush1.msra.mxu0 %v331
    %426 = vmatprep.subr.mxu0 0.0
    %427 = vmatpush1.msra.mxu0 %v332
    %428 = vmatprep.subr.mxu0 0.0
    %429 = vmatpush1.msra.mxu0 %v333
    %430 = vmatprep.subr.mxu0 0.0
    %431 = vmatpush1.msra.mxu0 %v334
    %432 = vmatprep.subr.mxu0 0.0
    %433 = vmatpush1.msra.mxu0 %v335
    %434 = vmatprep.subr.mxu0 0.0
    %435 = vmatpush1.msra.mxu0 %v336
    %436 = vmatprep.subr.mxu0 0.0
    %437 = vmatpush1.msra.mxu0 %v337
    %438 = vmatprep.subr.mxu0 0.0
    %439 = vmatpush1.msra.mxu0 %v338
    %440 = vmatprep.subr.mxu0 0.0
    %441 = vmatpush1.msra.mxu0 %v339
    %442 = vmatprep.subr.mxu0 0.0
    %443 = vmatpush1.msra.mxu0 %v340
    %444 = vmatprep.mubr.f32.mxu0 %v306
    %445 = vmatmul.mubr.f32.gmra.mrb[0].mxu0 %v305
    %v446 = vpop.f32.mrb[0].mxu0
    %v447 = vadd.f32 %v378, %v446
    %v448 = vpop.f32.mrb[0].mxu0
    %449 = vdwg.mxu0
    %450 = vmatprep.subr.mxu0 0.0
    %451 = vmatpush1.msra.mxu0 %v341
    %452 = vmatprep.subr.mxu0 0.0
    %453 = vmatpush1.msra.mxu0 %v342
    %454 = vmatprep.subr.mxu0 0.0
    %455 = vmatpush1.msra.mxu0 %v343
    %456 = vmatprep.subr.mxu0 0.0
    %457 = vmatpush1.msra.mxu0 %v344
    %458 = vmatprep.subr.mxu0 0.0
    %459 = vmatpush1.msra.mxu0 %v345
    %460 = vmatprep.subr.mxu0 0.0
    %461 = vmatpush1.msra.mxu0 %v346
    %462 = vmatprep.subr.mxu0 0.0
    %463 = vmatpush1.msra.mxu0 %v347
    %464 = vmatprep.subr.mxu0 0.0
    %465 = vmatpush1.msra.mxu0 %v348
    %466 = vmatprep.subr.mxu0 0.0
    %467 = vmatpush1.msra.mxu0 %v349
    %468 = vmatprep.subr.mxu0 0.0
    %469 = vmatpush1.msra.mxu0 %v350
    %470 = vmatprep.subr.mxu0 0.0
    %471 = vmatpush1.msra.mxu0 %v351
    %472 = vmatprep.subr.mxu0 0.0
    %473 = vmatpush1.msra.mxu0 %v352
    %474 = vmatprep.subr.mxu0 0.0
    %475 = vmatpush1.msra.mxu0 %v353
    %476 = vmatprep.subr.mxu0 0.0
    %477 = vmatpush1.msra.mxu0 %v354
    %478 = vmatprep.subr.mxu0 0.0
    %479 = vmatpush1.msra.mxu0 %v355
    %480 = vmatprep.subr.mxu0 0.0
    %481 = vmatpush1.msra.mxu0 %v356
    %482 = vmatprep.subr.mxu0 0.0
    %483 = vmatpush1.msra.mxu0 %v357
    %484 = vmatprep.subr.mxu0 0.0
    %485 = vmatpush1.msra.mxu0 %v358
    %486 = vmatprep.subr.mxu0 0.0
    %487 = vmatpush1.msra.mxu0 %v359
    %488 = vmatprep.subr.mxu0 0.0
    %489 = vmatpush1.msra.mxu0 %v360
    %490 = vmatprep.subr.mxu0 0.0
    %491 = vmatpush1.msra.mxu0 %v361
    %492 = vmatprep.subr.mxu0 0.0
    %493 = vmatpush1.msra.mxu0 %v362
    %494 = vmatprep.subr.mxu0 0.0
    %495 = vmatpush1.msra.mxu0 %v363
    %496 = vmatprep.subr.mxu0 0.0
    %497 = vmatpush1.msra.mxu0 %v364
    %498 = vmatprep.subr.mxu0 0.0
    %499 = vmatpush1.msra.mxu0 %v365
    %500 = vmatprep.subr.mxu0 0.0
    %501 = vmatpush1.msra.mxu0 %v366
    %502 = vmatprep.subr.mxu0 0.0
    %503 = vmatpush1.msra.mxu0 %v367
    %504 = vmatprep.subr.mxu0 0.0
    %505 = vmatpush1.msra.mxu0 %v368
    %506 = vmatprep.subr.mxu0 0.0
    %507 = vmatpush1.msra.mxu0 %v369
    %508 = vmatprep.subr.mxu0 0.0
    %509 = vmatpush1.msra.mxu0 %v370
    %510 = vmatprep.subr.mxu0 0.0
    %511 = vmatpush1.msra.mxu0 %v371
    %512 = vmatprep.subr.mxu0 0.0
    %513 = vmatpush1.msra.mxu0 %v372
    %514 = vmatprep.mubr.f32.mxu0 %v308
    %515 = vmatmul.mubr.f32.gmra.mrb[0].mxu0 %v307
    %v516 = vpop.f32.mrb[0].mxu0
    %v517 = vadd.f32 %v447, %v516
    %v518 = vpop.f32.mrb[0].mxu0
    %519 = vdwg.mxu0
    %520 = vst [vmem:[#allocation8] sm:$0xff] %v517
    // Predicated region
    $region34: #{tpu_custom_call.1} parent=1 // pred_check
      _
    $region35: #{tpu_custom_call.1} parent=1 // pred_check_branch
      %522 = sbr.rel (0) target = $region37
    $region36: #{tpu_custom_call.1} parent=1 // pred_region
      %s524 = ssub.s32 128, 128
      %525 = vsyncadd [#allocation4], %s524
      %s527 = sshll.u32 [#allocation8], 4
      %s528 = int_to_ptr.vmem [resolvable:$true] %s527
      %530 = dma.vmem_to_hbm [thread:$0]  %s528, 128, %s5, [#allocation4]
    $region37: #{tpu_custom_call.1} parent=1 // pred_fallthru
      _
    // Predicated region
    $region38: #{tpu_custom_call.1} parent=1 // pred_check
      _
    $region39: #{tpu_custom_call.1} parent=1 // pred_check_branch
      %532 = sbr.rel (0) target = $region41
    $region40: #{tpu_custom_call.1} parent=1 // pred_region
      %533 = dma.done [#allocation4], 128
    $region41: #{tpu_custom_call.1} parent=1 // pred_fallthru
      _
    %534 = vsyncpa [#allocation3], 1
    %535 = vsyncpa [#allocation6], 1
    %536 = vsyncpa [#allocation4], 1

</llo_original>
